<compile_context>
chip_gen: v5e
topology: v5e:2x2
jax: 0.10.0
libtpu: 0.0.40
codegen_flags: <defaults>
</compile_context>

<pallas_src>
import jax
import jax.numpy as jnp
from jax.experimental import pallas as pl
from jax.experimental.pallas import tpu as pltpu

# Module hyperparameters (the PyTorch module references input_size / hidden_size /
# output_size as globals; pick small deterministic values consistent with forward).
INPUT_SIZE = 32
HIDDEN_SIZE = 64
OUTPUT_SIZE = 16
BATCH = 200                     # deliberately NOT a multiple of 8 / 128

LARGE_BATCH_TILE = 256          # MXU row fill for the 2x256 MXU on v6e/v7x
LARGE_BATCH_THRESHOLD = 1024    # below this a single block is cheapest on all gens


def _round_up(n, m):
    return (n + m - 1) // m * m


def _mlp_kernel(x_ref, w1_ref, b1_ref, w2_ref, b2_ref, o_ref):
    # fc1: (TB, D_in) @ (D_in, H) -> f32 accumulation on the MXU.
    h = jnp.dot(x_ref[...], w1_ref[...], preferred_element_type=jnp.float32)
    h = jnp.maximum(h + b1_ref[...], 0.0)          # bias + ReLU on the VPU (f32)
    # fc2: (TB, H) @ (H, D_out) -> f32.
    y = jnp.dot(h, w2_ref[...], preferred_element_type=jnp.float32)
    o_ref[...] = (y + b2_ref[...]).astype(o_ref.dtype)


@jax.jit
def voice_recognition_net(x, w1, b1, w2, b2):
    """relu(x @ w1 + b1) @ w2 + b2, all compute inside one Pallas kernel.

    x: (B, D_in) f32; w1: (D_in, H) f32; b1: (1, H) f32;
    w2: (H, D_out) f32; b2: (1, D_out) f32.  Returns (B, D_out) f32.
    """
    batch, d_in = x.shape
    hidden = w1.shape[1]
    d_out = w2.shape[1]

    param_bytes = 4 * (w1.size + b1.size + w2.size + b2.size)
    flops_per_row = 2 * (d_in * hidden + hidden * d_out)

    if batch < LARGE_BATCH_THRESHOLD:
        # --- Small-batch path (used below): one block, one grid step, no padding.
        return pl.pallas_call(
            _mlp_kernel,
            out_shape=jax.ShapeDtypeStruct((batch, d_out), jnp.float32),
            grid_spec=pltpu.PrefetchScalarGridSpec(
                num_scalar_prefetch=0,
                grid=(1,),
                in_specs=[
                    # Full-array blocks: block_shape == array dims, so the
                    # (8, 128) divisibility rule does not apply.
                    pl.BlockSpec((batch, d_in), lambda i: (0, 0)),
                    pl.BlockSpec((d_in, hidden), lambda i: (0, 0)),
                    pl.BlockSpec((1, hidden), lambda i: (0, 0)),
                    pl.BlockSpec((hidden, d_out), lambda i: (0, 0)),
                    pl.BlockSpec((1, d_out), lambda i: (0, 0)),
                ],
                out_specs=pl.BlockSpec((batch, d_out), lambda i: (0, 0)),
            ),
            cost_estimate=pl.CostEstimate(
                flops=batch * flops_per_row,
                transcendentals=0,
                bytes_accessed=4 * (x.size + batch * d_out) + param_bytes),
        )(x, w1, b1, w2, b2)

    # --- Large-batch path: batch grid with 256-row tiles; weights/biases use
    # index_map lambda i: (0, 0) so they are DMA'd once and stay VMEM-resident
    # across all grid steps.  "parallel" lets v7x shard rows across its 2 TCs.
    tile_b = LARGE_BATCH_TILE
    bp = _round_up(batch, tile_b)
    xp = jnp.pad(x, ((0, bp - batch), (0, 0)))      # trailing rows are garbage,
    out = pl.pallas_call(                            # discarded by the final slice
        _mlp_kernel,
        out_shape=jax.ShapeDtypeStruct((bp, d_out), jnp.float32),
        grid_spec=pltpu.PrefetchScalarGridSpec(
            num_scalar_prefetch=0,
            grid=(bp // tile_b,),
            in_specs=[
                pl.BlockSpec((tile_b, d_in), lambda i: (i, 0)),
                pl.BlockSpec((d_in, hidden), lambda i: (0, 0)),
                pl.BlockSpec((1, hidden), lambda i: (0, 0)),
                pl.BlockSpec((hidden, d_out), lambda i: (0, 0)),
                pl.BlockSpec((1, d_out), lambda i: (0, 0)),
            ],
            out_specs=pl.BlockSpec((tile_b, d_out), lambda i: (i, 0)),
        ),
        compiler_params=pltpu.CompilerParams(
            dimension_semantics=("parallel",)),
        cost_estimate=pl.CostEstimate(
            flops=bp * flops_per_row,
            transcendentals=0,
            bytes_accessed=4 * (xp.size + bp * d_out) + param_bytes),
    )(xp, w1, b1, w2, b2)
    return out[:batch]


def init_params(key):
    """Deterministic parameter init matching nn.Linear shapes.

    PyTorch nn.Linear(in, out) stores weight (out, in) and bias (out,); we store
    the transposed weight (in, out) so the kernel computes x @ W.  Biases are 2D
    (1, out) for TPU-friendly broadcasting.
    """
    k1, k2, k3, k4 = jax.random.split(key, 4)
    bound1 = 1.0 / jnp.sqrt(jnp.float32(INPUT_SIZE))
    bound2 = 1.0 / jnp.sqrt(jnp.float32(HIDDEN_SIZE))
    w1 = jax.random.uniform(k1, (INPUT_SIZE, HIDDEN_SIZE), jnp.float32,
                            minval=-bound1, maxval=bound1)
    b1 = jax.random.uniform(k2, (1, HIDDEN_SIZE), jnp.float32,
                            minval=-bound1, maxval=bound1)
    w2 = jax.random.uniform(k3, (HIDDEN_SIZE, OUTPUT_SIZE), jnp.float32,
                            minval=-bound2, maxval=bound2)
    b2 = jax.random.uniform(k4, (1, OUTPUT_SIZE), jnp.float32,
                            minval=-bound2, maxval=bound2)
    return w1, b1, w2, b2


def _reference(x, w1, b1, w2, b2):
    h = jnp.maximum(x @ w1 + b1, 0.0)
    return h @ w2 + b2


if __name__ == "__main__":
    key = jax.random.PRNGKey(0)
    k_x, k_p, k_x2 = jax.random.split(key, 3)
    w1, b1, w2, b2 = init_params(k_p)

    # --- Small batch (single-block path, no padding anywhere). ---
    x = jax.random.normal(k_x, (BATCH, INPUT_SIZE), jnp.float32)
    out = jax.block_until_ready(voice_recognition_net(x, w1, b1, w2, b2))
    assert out.shape == (BATCH, OUTPUT_SIZE), out.shape
    ref = _reference(x, w1, b1, w2, b2)
    assert jnp.allclose(out, ref, atol=1e-2, rtol=1e-2), \
        "small-batch mismatch vs f32 reference"

    # --- Large batch (tiled 'parallel' grid path), exercised for coverage. ---
    big = 2048
    x2 = jax.random.normal(k_x2, (big, INPUT_SIZE), jnp.float32)
    out2 = jax.block_until_ready(voice_recognition_net(x2, w1, b1, w2, b2))
    assert out2.shape == (big, OUTPUT_SIZE), out2.shape
    ref2 = _reference(x2, w1, b1, w2, b2)
    assert jnp.allclose(out2, ref2, atol=1e-2, rtol=1e-2), \
        "large-batch mismatch vs f32 reference"

    print("KERNEL_OK")
</pallas_src>

<mosaic_0001>
module attributes {stable_mosaic.version = 11 : i64} {
  func.func @_mlp_kernel(%arg0: i32, %arg1: memref<200x32xf32, #tpu.memory_space<vmem>>, %arg2: memref<32x64xf32, #tpu.memory_space<vmem>>, %arg3: memref<1x64xf32, #tpu.memory_space<vmem>>, %arg4: memref<64x16xf32, #tpu.memory_space<vmem>>, %arg5: memref<1x16xf32, #tpu.memory_space<vmem>>, %arg6: memref<200x16xf32, #tpu.memory_space<vmem>>) attributes {dimension_semantics = [#tpu.dimension_semantics<arbitrary>], iteration_bounds = array<i64: 1>, scalar_prefetch = 0 : i64, scratch_operands = 0 : i64, tpu.core_type = #tpu.core_type<tc>, window_params = [{pipeline_mode = #tpu.pipeline_mode<synchronous>, transform_indices = @transform_0, window_bounds = array<i64: 200, 32>}, {pipeline_mode = #tpu.pipeline_mode<synchronous>, transform_indices = @transform_1, window_bounds = array<i64: 32, 64>}, {pipeline_mode = #tpu.pipeline_mode<synchronous>, transform_indices = @transform_2, window_bounds = array<i64: 1, 64>}, {pipeline_mode = #tpu.pipeline_mode<synchronous>, transform_indices = @transform_3, window_bounds = array<i64: 64, 16>}, {pipeline_mode = #tpu.pipeline_mode<synchronous>, transform_indices = @transform_4, window_bounds = array<i64: 1, 16>}, {pipeline_mode = #tpu.pipeline_mode<synchronous>, transform_indices = @transform_5, window_bounds = array<i64: 200, 16>}]} {
    %c0 = arith.constant 0 : index
    %c0_0 = arith.constant 0 : index
    %0 = vector.load %arg1[%c0, %c0_0] : memref<200x32xf32, #tpu.memory_space<vmem>>, vector<200x32xf32>
    %c0_1 = arith.constant 0 : index
    %c0_2 = arith.constant 0 : index
    %1 = vector.load %arg2[%c0_1, %c0_2] : memref<32x64xf32, #tpu.memory_space<vmem>>, vector<32x64xf32>
    %cst = arith.constant dense<0.000000e+00> : vector<200x64xf32>
    %2 = tpu.matmul %0, %1, %cst {dimension_numbers = #tpu.dot_dimension_numbers<[1], [0], [0], [1], [0, 0, 1, 1], [], []>} : vector<200x32xf32>, vector<32x64xf32>, vector<200x64xf32> -> vector<200x64xf32>
    %c0_3 = arith.constant 0 : index
    %c0_4 = arith.constant 0 : index
    %3 = vector.load %arg3[%c0_3, %c0_4] : memref<1x64xf32, #tpu.memory_space<vmem>>, vector<1x64xf32>
    %4 = vector.broadcast %3 : vector<1x64xf32> to vector<200x64xf32>
    %5 = arith.addf %2, %4 : vector<200x64xf32>
    %cst_5 = arith.constant 0.000000e+00 : f32
    %6 = vector.broadcast %cst_5 : f32 to vector<200x64xf32>
    %7 = arith.maximumf %5, %6 : vector<200x64xf32>
    %c0_6 = arith.constant 0 : index
    %c0_7 = arith.constant 0 : index
    %8 = vector.load %arg4[%c0_6, %c0_7] : memref<64x16xf32, #tpu.memory_space<vmem>>, vector<64x16xf32>
    %cst_8 = arith.constant dense<0.000000e+00> : vector<200x16xf32>
    %9 = tpu.matmul %7, %8, %cst_8 {dimension_numbers = #tpu.dot_dimension_numbers<[1], [0], [0], [1], [0, 0, 1, 1], [], []>} : vector<200x64xf32>, vector<64x16xf32>, vector<200x16xf32> -> vector<200x16xf32>
    %c0_9 = arith.constant 0 : index
    %c0_10 = arith.constant 0 : index
    %10 = vector.load %arg5[%c0_9, %c0_10] : memref<1x16xf32, #tpu.memory_space<vmem>>, vector<1x16xf32>
    %11 = vector.broadcast %10 : vector<1x16xf32> to vector<200x16xf32>
    %12 = arith.addf %9, %11 : vector<200x16xf32>
    %c0_11 = arith.constant 0 : index
    %c0_12 = arith.constant 0 : index
    %13 = vector.load %arg6[%c0_11, %c0_12] : memref<200x16xf32, #tpu.memory_space<vmem>>, vector<200x16xf32>
    tpu.vector_store %arg6[%c0_11, %c0_12], %12 {strides = array<i32>} : memref<200x16xf32, #tpu.memory_space<vmem>>, vector<200x16xf32>,
    return
  }
  func.func @transform_0(%arg0: i32) -> (i32, i32) {
    %c0_i32 = arith.constant 0 : i32
    %c0_i32_0 = arith.constant 0 : i32
    %c0_i32_1 = arith.constant 0 : i32
    return %c0_i32, %c0_i32_0 : i32, i32
  }
  func.func @transform_1(%arg0: i32) -> (i32, i32) {
    %c0_i32 = arith.constant 0 : i32
    %c0_i32_0 = arith.constant 0 : i32
    %c0_i32_1 = arith.constant 0 : i32
    return %c0_i32, %c0_i32_0 : i32, i32
  }
  func.func @transform_2(%arg0: i32) -> (i32, i32) {
    %c0_i32 = arith.constant 0 : i32
    %c0_i32_0 = arith.constant 0 : i32
    %c0_i32_1 = arith.constant 0 : i32
    return %c0_i32, %c0_i32_0 : i32, i32
  }
  func.func @transform_3(%arg0: i32) -> (i32, i32) {
    %c0_i32 = arith.constant 0 : i32
    %c0_i32_0 = arith.constant 0 : i32
    %c0_i32_1 = arith.constant 0 : i32
    return %c0_i32, %c0_i32_0 : i32, i32
  }
  func.func @transform_4(%arg0: i32) -> (i32, i32) {
    %c0_i32 = arith.constant 0 : i32
    %c0_i32_0 = arith.constant 0 : i32
    %c0_i32_1 = arith.constant 0 : i32
    return %c0_i32, %c0_i32_0 : i32, i32
  }
  func.func @transform_5(%arg0: i32) -> (i32, i32) {
    %c0_i32 = arith.constant 0 : i32
    %c0_i32_0 = arith.constant 0 : i32
    %c0_i32_1 = arith.constant 0 : i32
    return %c0_i32, %c0_i32_0 : i32, i32
  }
}

</mosaic_0001>

<llo_original>
// kernel: voice_recognition_net.1
$region0: #{voice_recognition_net.1}
  #allocation0 [shape = 'u32[]', space=smem, size = 0x4, offset = 0x4, fixed_abs, tag = 'smem constant byte address 0x4 - core index']
  #allocation1 [shape = 'u32[72,128]{1,0:T(1,128)}', space=vmem, size = 0x9000, scoped, tag = 'internal scratch']
  %s0 = inlined_call_operand.vmem [shape: f32[200,32], index: 0, kind: input, shape index: {}]
  %s1 = inlined_call_operand.vmem [shape: f32[32,64], index: 1, kind: input, shape index: {}]
  %s2 = inlined_call_operand.vmem [shape: f32[1,64], index: 2, kind: input, shape index: {}]
  %s3 = inlined_call_operand.vmem [shape: f32[64,16], index: 3, kind: input, shape index: {}]
  %s4 = inlined_call_operand.vmem [shape: f32[1,16], index: 4, kind: input, shape index: {}]
  %s5 = inlined_call_operand.vmem [shape: f32[200,16], index: 5, kind: output, shape index: {}]
  %s6 = sld [smem:[#allocation0]]
  $region30: #{voice_recognition_net.1} parent=0
    _
  %s8 = ssub.s32 1, %s6
  %s9 = scalar_select 0, %s8, %s6
  // Predicated region
  $region2: #{voice_recognition_net.1} parent=0 // pred_check
    _
  $region3: #{voice_recognition_net.1} parent=0 // pred_check_branch
    %11 = sbr.rel (0) target = $region5
  $region4: #{voice_recognition_net.1} parent=0 // pred_region
    _
  $region5: #{voice_recognition_net.1} parent=0 // pred_fallthru
    _
  // Predicated region
  $region6: #{voice_recognition_net.1} parent=0 // pred_check
    _
  $region7: #{voice_recognition_net.1} parent=0 // pred_check_branch
    %13 = sbr.rel (0) target = $region9
  $region8: #{voice_recognition_net.1} parent=0 // pred_region
    _
  $region9: #{voice_recognition_net.1} parent=0 // pred_fallthru
    _
  // Predicated region
  $region10: #{voice_recognition_net.1} parent=0 // pred_check
    _
  $region11: #{voice_recognition_net.1} parent=0 // pred_check_branch
    %15 = sbr.rel (0) target = $region13
  $region12: #{voice_recognition_net.1} parent=0 // pred_region
    _
  $region13: #{voice_recognition_net.1} parent=0 // pred_fallthru
    _
  // Predicated region
  $region14: #{voice_recognition_net.1} parent=0 // pred_check
    _
  $region15: #{voice_recognition_net.1} parent=0 // pred_check_branch
    %17 = sbr.rel (0) target = $region17
  $region16: #{voice_recognition_net.1} parent=0 // pred_region
    _
  $region17: #{voice_recognition_net.1} parent=0 // pred_fallthru
    _
  // Predicated region
  $region18: #{voice_recognition_net.1} parent=0 // pred_check
    _
  $region19: #{voice_recognition_net.1} parent=0 // pred_check_branch
    %19 = sbr.rel (0) target = $region21
  $region20: #{voice_recognition_net.1} parent=0 // pred_region
    _
  $region21: #{voice_recognition_net.1} parent=0 // pred_fallthru
    _
  %v20 = vld [vmem:[%s0] sm:$0xff]
  %v21 = vld [vmem:[%s0 + $0x8] sm:$0xff]
  %v22 = vld [vmem:[%s0 + $0x10] sm:$0xff]
  %v23 = vld [vmem:[%s0 + $0x18] sm:$0xff]
  %v24 = vld [vmem:[%s0 + $0x20] sm:$0xff]
  %v25 = vld [vmem:[%s0 + $0x28] sm:$0xff]
  %v26 = vld [vmem:[%s0 + $0x30] sm:$0xff]
  %v27 = vld [vmem:[%s0 + $0x38] sm:$0xff]
  %v28 = vld [vmem:[%s0 + $0x40] sm:$0xff]
  %v29 = vld [vmem:[%s0 + $0x48] sm:$0xff]
  %v30 = vld [vmem:[%s0 + $0x50] sm:$0xff]
  %v31 = vld [vmem:[%s0 + $0x58] sm:$0xff]
  %v32 = vld [vmem:[%s0 + $0x60] sm:$0xff]
  %v33 = vld [vmem:[%s0 + $0x68] sm:$0xff]
  %v34 = vld [vmem:[%s0 + $0x70] sm:$0xff]
  %v35 = vld [vmem:[%s0 + $0x78] sm:$0xff]
  %v36 = vld [vmem:[%s0 + $0x80] sm:$0xff]
  %v37 = vld [vmem:[%s0 + $0x88] sm:$0xff]
  %v38 = vld [vmem:[%s0 + $0x90] sm:$0xff]
  %v39 = vld [vmem:[%s0 + $0x98] sm:$0xff]
  %v40 = vld [vmem:[%s0 + $0xa0] sm:$0xff]
  %v41 = vld [vmem:[%s0 + $0xa8] sm:$0xff]
  %v42 = vld [vmem:[%s0 + $0xb0] sm:$0xff]
  %v43 = vld [vmem:[%s0 + $0xb8] sm:$0xff]
  %v44 = vld [vmem:[%s0 + $0xc0] sm:$0xff]
  %v45 = vld [vmem:[%s1] sm:$0xff]
  %v46 = vld [vmem:[%s1 + $0x8] sm:$0xff]
  %v47 = vld [vmem:[%s1 + $0x10] sm:$0xff]
  %v48 = vld [vmem:[%s1 + $0x18] sm:$0xff]
  %v49 = vld [vmem:[%s2] sm:$0x1]
  %v51 = vperm.slane %v49, 0
  %vm53 = vcmask 261120
  %v55 = vsel %vm53, %v20, 0
  %v58 = vsel %vm53, %v21, 0
  %v61 = vsel %vm53, %v22, 0
  %v64 = vsel %vm53, %v23, 0
  %v67 = vsel %vm53, %v24, 0
  %v70 = vsel %vm53, %v25, 0
  %v73 = vsel %vm53, %v26, 0
  %v76 = vsel %vm53, %v27, 0
  %v79 = vsel %vm53, %v28, 0
  %v82 = vsel %vm53, %v29, 0
  %v85 = vsel %vm53, %v30, 0
  %v88 = vsel %vm53, %v31, 0
  %v91 = vsel %vm53, %v32, 0
  %v94 = vsel %vm53, %v33, 0
  %v97 = vsel %vm53, %v34, 0
  %v100 = vsel %vm53, %v35, 0
  %v103 = vsel %vm53, %v36, 0
  %v106 = vsel %vm53, %v37, 0
  %v109 = vsel %vm53, %v38, 0
  %v112 = vsel %vm53, %v39, 0
  %v115 = vsel %vm53, %v40, 0
  %v118 = vsel %vm53, %v41, 0
  %v121 = vsel %vm53, %v42, 0
  %v124 = vsel %vm53, %v43, 0
  %v127 = vsel %vm53, %v44, 0
  %129 = vmatpush.msra.mxu0 0.0
  %130 = vmatpush.msra.mxu0 0.0
  %131 = vmatpush.msra.mxu0 0.0
  %132 = vmatpush.msra.mxu0 0.0
  %133 = vmatpush.msra.mxu0 0.0
  %134 = vmatpush.msra.mxu0 0.0
  %135 = vmatpush.msra.mxu0 0.0
  %136 = vmatpush.msra.mxu0 0.0
  %137 = vmatpush.msra.mxu0 0.0
  %138 = vmatpush.msra.mxu0 0.0
  %139 = vmatpush.msra.mxu0 0.0
  %140 = vmatpush.msra.mxu0 0.0
  %141 = vmatpush.msra.mxu0 %v48
  %142 = vmatpush.msra.mxu0 %v47
  %143 = vmatpush.msra.mxu0 %v46
  %144 = vmatpush.msra.mxu0 %v45
  %145 = vmatmul.f32.gmra.mxu0 %v55
  %v146 = vpop.f32.mrf.mxu0
  %v147 = vadd.f32 %v51, %v146
  %148 = vmatmul.f32.gmra.mxu0 %v58
  %v149 = vpop.f32.mrf.mxu0
  %v150 = vadd.f32 %v51, %v149
  %151 = vmatmul.f32.gmra.mxu0 %v61
  %v152 = vpop.f32.mrf.mxu0
  %v153 = vadd.f32 %v51, %v152
  %154 = vmatmul.f32.gmra.mxu0 %v64
  %v155 = vpop.f32.mrf.mxu0
  %v156 = vadd.f32 %v51, %v155
  %157 = vmatmul.f32.gmra.mxu0 %v67
  %v158 = vpop.f32.mrf.mxu0
  %v159 = vadd.f32 %v51, %v158
  %160 = vmatmul.f32.gmra.mxu0 %v70
  %v161 = vpop.f32.mrf.mxu0
  %v162 = vadd.f32 %v51, %v161
  %163 = vmatmul.f32.gmra.mxu0 %v73
  %v164 = vpop.f32.mrf.mxu0
  %v165 = vadd.f32 %v51, %v164
  %166 = vmatmul.f32.gmra.mxu0 %v76
  %v167 = vpop.f32.mrf.mxu0
  %v168 = vadd.f32 %v51, %v167
  %169 = vmatmul.f32.gmra.mxu0 %v79
  %v170 = vpop.f32.mrf.mxu0
  %v171 = vadd.f32 %v51, %v170
  %172 = vmatmul.f32.gmra.mxu0 %v82
  %v173 = vpop.f32.mrf.mxu0
  %v174 = vadd.f32 %v51, %v173
  %175 = vmatmul.f32.gmra.mxu0 %v85
  %v176 = vpop.f32.mrf.mxu0
  %v177 = vadd.f32 %v51, %v176
  %178 = vmatmul.f32.gmra.mxu0 %v88
  %v179 = vpop.f32.mrf.mxu0
  %v180 = vadd.f32 %v51, %v179
  %181 = vmatmul.f32.gmra.mxu0 %v91
  %v182 = vpop.f32.mrf.mxu0
  %v183 = vadd.f32 %v51, %v182
  %184 = vmatmul.f32.gmra.mxu0 %v94
  %v185 = vpop.f32.mrf.mxu0
  %v186 = vadd.f32 %v51, %v185
  %187 = vmatmul.f32.gmra.mxu0 %v97
  %v188 = vpop.f32.mrf.mxu0
  %v189 = vadd.f32 %v51, %v188
  %190 = vmatmul.f32.gmra.mxu0 %v100
  %v191 = vpop.f32.mrf.mxu0
  %v192 = vadd.f32 %v51, %v191
  %193 = vmatmul.f32.gmra.mxu0 %v103
  %v194 = vpop.f32.mrf.mxu0
  %v195 = vadd.f32 %v51, %v194
  %196 = vmatmul.f32.gmra.mxu0 %v106
  %v197 = vpop.f32.mrf.mxu0
  %v198 = vadd.f32 %v51, %v197
  %199 = vmatmul.f32.gmra.mxu0 %v109
  %v200 = vpop.f32.mrf.mxu0
  %v201 = vadd.f32 %v51, %v200
  %202 = vmatmul.f32.gmra.mxu0 %v112
  %v203 = vpop.f32.mrf.mxu0
  %v204 = vadd.f32 %v51, %v203
  %205 = vmatmul.f32.gmra.mxu0 %v115
  %v206 = vpop.f32.mrf.mxu0
  %v207 = vadd.f32 %v51, %v206
  %208 = vmatmul.f32.gmra.mxu0 %v118
  %v209 = vpop.f32.mrf.mxu0
  %v210 = vadd.f32 %v51, %v209
  %211 = vmatmul.f32.gmra.mxu0 %v121
  %v212 = vpop.f32.mrf.mxu0
  %v213 = vadd.f32 %v51, %v212
  %214 = vmatmul.f32.gmra.mxu0 %v124
  %v215 = vpop.f32.mrf.mxu0
  %v216 = vadd.f32 %v51, %v215
  %217 = vmatmul.f32.gmra.mxu0 %v127
  %v218 = vpop.f32.mrf.mxu0
  %v219 = vadd.f32 %v51, %v218
  %220 = vdwg.mxu0
  %v221 = vmax.f32 %v147, 0.0
  %v222 = vmax.f32 %v150, 0.0
  %v223 = vmax.f32 %v153, 0.0
  %v224 = vmax.f32 %v156, 0.0
  %v225 = vmax.f32 %v159, 0.0
  %v226 = vmax.f32 %v162, 0.0
  %v227 = vmax.f32 %v165, 0.0
  %v228 = vmax.f32 %v168, 0.0
  %v229 = vmax.f32 %v171, 0.0
  %v230 = vmax.f32 %v174, 0.0
  %v231 = vmax.f32 %v177, 0.0
  %v232 = vmax.f32 %v180, 0.0
  %v233 = vmax.f32 %v183, 0.0
  %v234 = vmax.f32 %v186, 0.0
  %v235 = vmax.f32 %v189, 0.0
  %v236 = vmax.f32 %v192, 0.0
  %v237 = vmax.f32 %v195, 0.0
  %v238 = vmax.f32 %v198, 0.0
  %v239 = vmax.f32 %v201, 0.0
  %v240 = vmax.f32 %v204, 0.0
  %v241 = vmax.f32 %v207, 0.0
  %v242 = vmax.f32 %v210, 0.0
  %v243 = vmax.f32 %v213, 0.0
  %v244 = vmax.f32 %v216, 0.0
  %v245 = vmax.f32 %v219, 0.0
  %v246 = vld [vmem:[%s3] sm:$0xff]
  %v247 = vld [vmem:[%s3 + $0x8] sm:$0xff]
  %v248 = vld [vmem:[%s3 + $0x10] sm:$0xff]
  %v249 = vld [vmem:[%s3 + $0x18] sm:$0xff]
  %v250 = vld [vmem:[%s3 + $0x20] sm:$0xff]
  %v251 = vld [vmem:[%s3 + $0x28] sm:$0xff]
  %v252 = vld [vmem:[%s3 + $0x30] sm:$0xff]
  %v253 = vld [vmem:[%s3 + $0x38] sm:$0xff]
  %v254 = vld [vmem:[%s4] sm:$0x1]
  %v256 = vperm.slane %v254, 0
  %vm258 = vcmask 523264
  %v260 = vsel %vm258, %v221, 0
  %v263 = vsel %vm258, %v222, 0
  %v266 = vsel %vm258, %v223, 0
  %v269 = vsel %vm258, %v224, 0
  %v272 = vsel %vm258, %v225, 0
  %v275 = vsel %vm258, %v226, 0
  %v278 = vsel %vm258, %v227, 0
  %v281 = vsel %vm258, %v228, 0
  %v284 = vsel %vm258, %v229, 0
  %v287 = vsel %vm258, %v230, 0
  %v290 = vsel %vm258, %v231, 0
  %v293 = vsel %vm258, %v232, 0
  %v296 = vsel %vm258, %v233, 0
  %v299 = vsel %vm258, %v234, 0
  %v302 = vsel %vm258, %v235, 0
  %v305 = vsel %vm258, %v236, 0
  %v308 = vsel %vm258, %v237, 0
  %v311 = vsel %vm258, %v238, 0
  %v314 = vsel %vm258, %v239, 0
  %v317 = vsel %vm258, %v240, 0
  %v320 = vsel %vm258, %v241, 0
  %v323 = vsel %vm258, %v242, 0
  %v326 = vsel %vm258, %v243, 0
  %v329 = vsel %vm258, %v244, 0
  %v332 = vsel %vm258, %v245, 0
  %334 = vmatpush.msra.mxu0 0.0
  %335 = vmatpush.msra.mxu0 0.0
  %336 = vmatpush.msra.mxu0 0.0
  %337 = vmatpush.msra.mxu0 0.0
  %338 = vmatpush.msra.mxu0 0.0
  %339 = vmatpush.msra.mxu0 0.0
  %340 = vmatpush.msra.mxu0 0.0
  %341 = vmatpush.msra.mxu0 0.0
  %342 = vmatpush.msra.mxu0 %v253
  %343 = vmatpush.msra.mxu0 %v252
  %344 = vmatpush.msra.mxu0 %v251
  %345 = vmatpush.msra.mxu0 %v250
  %346 = vmatpush.msra.mxu0 %v249
  %347 = vmatpush.msra.mxu0 %v248
  %348 = vmatpush.msra.mxu0 %v247
  %349 = vmatpush.msra.mxu0 %v246
  %350 = vmatmul.f32.gmra.mxu0 %v260
  %v351 = vpop.f32.mrf.mxu0
  %v352 = vadd.f32 %v256, %v351
  %353 = vmatmul.f32.gmra.mxu0 %v263
  %v354 = vpop.f32.mrf.mxu0
  %v355 = vadd.f32 %v256, %v354
  %356 = vmatmul.f32.gmra.mxu0 %v266
  %v357 = vpop.f32.mrf.mxu0
  %v358 = vadd.f32 %v256, %v357
  %359 = vmatmul.f32.gmra.mxu0 %v269
  %v360 = vpop.f32.mrf.mxu0
  %v361 = vadd.f32 %v256, %v360
  %362 = vmatmul.f32.gmra.mxu0 %v272
  %v363 = vpop.f32.mrf.mxu0
  %v364 = vadd.f32 %v256, %v363
  %365 = vmatmul.f32.gmra.mxu0 %v275
  %v366 = vpop.f32.mrf.mxu0
  %v367 = vadd.f32 %v256, %v366
  %368 = vmatmul.f32.gmra.mxu0 %v278
  %v369 = vpop.f32.mrf.mxu0
  %v370 = vadd.f32 %v256, %v369
  %371 = vmatmul.f32.gmra.mxu0 %v281
  %v372 = vpop.f32.mrf.mxu0
  %v373 = vadd.f32 %v256, %v372
  %374 = vmatmul.f32.gmra.mxu0 %v284
  %v375 = vpop.f32.mrf.mxu0
  %v376 = vadd.f32 %v256, %v375
  %377 = vmatmul.f32.gmra.mxu0 %v287
  %v378 = vpop.f32.mrf.mxu0
  %v379 = vadd.f32 %v256, %v378
  %380 = vmatmul.f32.gmra.mxu0 %v290
  %v381 = vpop.f32.mrf.mxu0
  %v382 = vadd.f32 %v256, %v381
  %383 = vmatmul.f32.gmra.mxu0 %v293
  %v384 = vpop.f32.mrf.mxu0
  %v385 = vadd.f32 %v256, %v384
  %386 = vmatmul.f32.gmra.mxu0 %v296
  %v387 = vpop.f32.mrf.mxu0
  %v388 = vadd.f32 %v256, %v387
  %389 = vmatmul.f32.gmra.mxu0 %v299
  %v390 = vpop.f32.mrf.mxu0
  %v391 = vadd.f32 %v256, %v390
  %392 = vmatmul.f32.gmra.mxu0 %v302
  %v393 = vpop.f32.mrf.mxu0
  %v394 = vadd.f32 %v256, %v393
  %395 = vmatmul.f32.gmra.mxu0 %v305
  %v396 = vpop.f32.mrf.mxu0
  %v397 = vadd.f32 %v256, %v396
  %398 = vmatmul.f32.gmra.mxu0 %v308
  %v399 = vpop.f32.mrf.mxu0
  %v400 = vadd.f32 %v256, %v399
  %401 = vmatmul.f32.gmra.mxu0 %v311
  %v402 = vpop.f32.mrf.mxu0
  %v403 = vadd.f32 %v256, %v402
  %404 = vmatmul.f32.gmra.mxu0 %v314
  %v405 = vpop.f32.mrf.mxu0
  %v406 = vadd.f32 %v256, %v405
  %407 = vmatmul.f32.gmra.mxu0 %v317
  %v408 = vpop.f32.mrf.mxu0
  %v409 = vadd.f32 %v256, %v408
  %410 = vmatmul.f32.gmra.mxu0 %v320
  %v411 = vpop.f32.mrf.mxu0
  %v412 = vadd.f32 %v256, %v411
  %413 = vmatmul.f32.gmra.mxu0 %v323
  %v414 = vpop.f32.mrf.mxu0
  %v415 = vadd.f32 %v256, %v414
  %416 = vmatmul.f32.gmra.mxu0 %v326
  %v417 = vpop.f32.mrf.mxu0
  %v418 = vadd.f32 %v256, %v417
  %419 = vmatmul.f32.gmra.mxu0 %v329
  %v420 = vpop.f32.mrf.mxu0
  %v421 = vadd.f32 %v256, %v420
  %422 = vmatmul.f32.gmra.mxu0 %v332
  %v423 = vpop.f32.mrf.mxu0
  %v424 = vadd.f32 %v256, %v423
  %425 = vdwg.mxu0
  %vm426 = vcmask 130048
  %427 = vst.msk [vmem:[%s5] sm:$0xff] %vm426, %v352
  %428 = vst.msk [vmem:[%s5 + $0x8] sm:$0xff] %vm426, %v355
  %429 = vst.msk [vmem:[%s5 + $0x10] sm:$0xff] %vm426, %v358
  %430 = vst.msk [vmem:[%s5 + $0x18] sm:$0xff] %vm426, %v361
  %431 = vst.msk [vmem:[%s5 + $0x20] sm:$0xff] %vm426, %v364
  %432 = vst.msk [vmem:[%s5 + $0x28] sm:$0xff] %vm426, %v367
  %433 = vst.msk [vmem:[%s5 + $0x30] sm:$0xff] %vm426, %v370
  %434 = vst.msk [vmem:[%s5 + $0x38] sm:$0xff] %vm426, %v373
  %435 = vst.msk [vmem:[%s5 + $0x40] sm:$0xff] %vm426, %v376
  %436 = vst.msk [vmem:[%s5 + $0x48] sm:$0xff] %vm426, %v379
  %437 = vst.msk [vmem:[%s5 + $0x50] sm:$0xff] %vm426, %v382
  %438 = vst.msk [vmem:[%s5 + $0x58] sm:$0xff] %vm426, %v385
  %439 = vst.msk [vmem:[%s5 + $0x60] sm:$0xff] %vm426, %v388
  %440 = vst.msk [vmem:[%s5 + $0x68] sm:$0xff] %vm426, %v391
  %441 = vst.msk [vmem:[%s5 + $0x70] sm:$0xff] %vm426, %v394
  %442 = vst.msk [vmem:[%s5 + $0x78] sm:$0xff] %vm426, %v397
  %443 = vst.msk [vmem:[%s5 + $0x80] sm:$0xff] %vm426, %v400
  %444 = vst.msk [vmem:[%s5 + $0x88] sm:$0xff] %vm426, %v403
  %445 = vst.msk [vmem:[%s5 + $0x90] sm:$0xff] %vm426, %v406
  %446 = vst.msk [vmem:[%s5 + $0x98] sm:$0xff] %vm426, %v409
  %447 = vst.msk [vmem:[%s5 + $0xa0] sm:$0xff] %vm426, %v412
  %448 = vst.msk [vmem:[%s5 + $0xa8] sm:$0xff] %vm426, %v415
  %449 = vst.msk [vmem:[%s5 + $0xb0] sm:$0xff] %vm426, %v418
  %450 = vst.msk [vmem:[%s5 + $0xb8] sm:$0xff] %vm426, %v421
  %451 = vst.msk [vmem:[%s5 + $0xc0] sm:$0xff] %vm426, %v424
  // Predicated region
  $region22: #{voice_recognition_net.1} parent=0 // pred_check
    _
  $region23: #{voice_recognition_net.1} parent=0 // pred_check_branch
    %453 = sbr.rel (0) target = $region25
  $region24: #{voice_recognition_net.1} parent=0 // pred_region
    _
  $region25: #{voice_recognition_net.1} parent=0 // pred_fallthru
    _
  // Predicated region
  $region26: #{voice_recognition_net.1} parent=0 // pred_check
    _
  $region27: #{voice_recognition_net.1} parent=0 // pred_check_branch
    %455 = sbr.rel (0) target = $region29
  $region28: #{voice_recognition_net.1} parent=0 // pred_region
    _
  $region29: #{voice_recognition_net.1} parent=0 // pred_fallthru
    _

</llo_original>
